<compile_context>
chip_gen: v7x
topology: tpu7x:2x2x1
jax: 0.10.0
libtpu: 0.0.40
codegen_flags: <defaults>
</compile_context>

<pallas_src>
import jax
import jax.numpy as jnp
from jax.experimental import pallas as pl
from jax.experimental.pallas import tpu as pltpu

# Constructor constants (chosen deterministically for the demo).
MIN_SLOPE = 0.01
WIDTH_CONSTRAIN = 1.0

# Tile byte cap: 16 MiB (min default scoped VMEM, v5e) / 4 buffers, with
# headroom for Mosaic internal scratch. 2 MiB tiles are already on the
# measured HBM-roofline plateau.
_TILE_BYTE_CAP = 2 * 1024 * 1024


def _diff_sigmoid_kernel(p_ref, x_ref, o_ref):
    # p_ref (SMEM, scalar-prefetched, shape (4,)):
    #   [c, s_eff, tanh(s*w/2), 1/cosh(s*w/2)]
    c = p_ref[0]
    s = p_ref[1]
    tanh_a = p_ref[2]
    sech_a = p_ref[3]

    z = s * (x_ref[...] - c)
    # One EUP exp per element, overflow-free:
    #   e = exp(-|z|) in (0, 1];   cosh(z) = (1 + e*e) / (2e)
    #   y = sinh(a)/(cosh(a)+cosh(z)) = tanh(a)*2e / (2e + sech(a)*(1 + e*e))
    e = jnp.exp(-jnp.abs(z))
    two_e = e + e
    o_ref[...] = (tanh_a * two_e
                  / (two_e + sech_a * (1.0 + e * e))).astype(o_ref.dtype)


def _round_up(v, m):
    return -(-v // m) * m


def _sublane_multiple(dtype):
    # f32 -> 8, bf16/f16 -> 16, int8/fp8 -> 32 sublanes per packed vreg row.
    return {4: 8, 2: 16, 1: 32}.get(jnp.dtype(dtype).itemsize, 8)


def _pick_lanes(total, row_mult):
    """Lane-dense last dim (multiple of 128). Never raises."""
    candidates = (4096, 2048, 1024, 512, 256, 128)
    # Best: clean (row_mult*k, 128*m) factorization -> fully unmasked stores.
    for lanes in candidates:
        if total % lanes == 0 and (total // lanes) % row_mult == 0:
            return lanes
    # Next: lane-dense factorization; ragged last row-block is masked by Pallas.
    for lanes in candidates:
        if total % lanes == 0:
            return lanes
    # Fallback: pad the flat array up to a multiple of `lanes`, slice the tail.
    return 512 if total >= 512 else 128


def _pick_block_rows(rows, lanes, itemsize, row_mult):
    """Largest multiple-of-row_mult row count whose tile fits the byte cap."""
    max_rows = max(row_mult,
                   (_TILE_BYTE_CAP // (lanes * itemsize)) // row_mult * row_mult)
    return min(_round_up(rows, row_mult), max_rows)


def joint_diff_sigmoid_memb_func(x, c, s, center_width, *,
                                 width_constrain=WIDTH_CONSTRAIN,
                                 min_slope=MIN_SLOPE):
    """x: float32 array (NCHW in the demo). c, s, center_width: scalar params."""
    orig_shape = x.shape
    total = x.size
    itemsize = jnp.dtype(x.dtype).itemsize
    row_mult = _sublane_multiple(x.dtype)

    lanes = _pick_lanes(total, row_mult)
    padded_total = _round_up(total, lanes)
    xf = x.reshape(-1)
    if padded_total != total:
        xf = jnp.pad(xf, (0, padded_total - total))
    rows = padded_total // lanes
    x2d = xf.reshape(rows, lanes)

    # Parameter-only scalar precompute (handful of scalar flops, fused by XLA).
    # tanh/sech folding keeps values bounded even for huge slope*width.
    c_f = jnp.asarray(c, jnp.float32)
    s_eff = jnp.abs(jnp.asarray(s, jnp.float32) - min_slope) + min_slope
    m_s = jnp.float32(width_constrain) / s_eff
    w = jnp.abs(jnp.asarray(center_width, jnp.float32) - m_s) + m_s
    a = 0.5 * s_eff * w
    params = jnp.stack([c_f, s_eff, jnp.tanh(a), 1.0 / jnp.cosh(a)])

    block_rows = _pick_block_rows(rows, lanes, itemsize, row_mult)
    num_blocks = pl.cdiv(rows, block_rows)
    # v7x has 2 TensorCores: if a non-trivial input collapsed into one tile,
    # split so the "parallel" grid axis can shard across both cores.
    if (num_blocks == 1 and padded_total * itemsize >= (512 * 1024)
            and rows >= 2 * row_mult):
        block_rows = _round_up(pl.cdiv(rows, 2), row_mult)
        num_blocks = pl.cdiv(rows, block_rows)

    out2d = pl.pallas_call(
        _diff_sigmoid_kernel,
        out_shape=jax.ShapeDtypeStruct((rows, lanes), x.dtype),
        grid_spec=pltpu.PrefetchScalarGridSpec(
            num_scalar_prefetch=1,                 # params land in SMEM once
            grid=(num_blocks,),
            in_specs=[pl.BlockSpec((block_rows, lanes), lambda i, p: (i, 0))],
            out_specs=pl.BlockSpec((block_rows, lanes), lambda i, p: (i, 0)),
        ),
        compiler_params=pltpu.CompilerParams(
            dimension_semantics=("parallel",)),    # shards across TCs on v7x
    )(params, x2d)

    out = out2d.reshape(-1)
    if padded_total != total:
        out = out[:total]
    return out.reshape(orig_shape)


def _reference(x, c, s_param, center_width, width_constrain, min_slope):
    s = jnp.abs(s_param - min_slope) + min_slope
    m_s = width_constrain / s
    w = jnp.abs(center_width - m_s) + m_s
    z = s * (x - c)
    return (jnp.sinh(s * w / 2.0)
            / (jnp.cosh(s * w / 2.0) + jnp.cosh(z))).astype(jnp.float32)


if __name__ == "__main__":
    key = jax.random.PRNGKey(0)
    # NCHW input, small demo shape.
    x = jax.random.normal(key, (2, 4, 16, 16), dtype=jnp.float32) * 2.0

    # Deterministic scalar parameter init (module registers c, s, center_width).
    c = jnp.float32(0.25)             # center
    s = jnp.float32(1.50)             # slope parameter
    center_width = jnp.float32(1.00)  # center_width parameter

    y = joint_diff_sigmoid_memb_func(x, c, s, center_width)
    jax.block_until_ready(y)

    y_ref = _reference(x, c, s, center_width, WIDTH_CONSTRAIN, MIN_SLOPE)
    assert y.shape == x.shape and y.dtype == x.dtype
    assert jnp.max(jnp.abs(y - y_ref)) < 1e-5

    print("KERNEL_OK")
</pallas_src>

<mosaic_0001>
module attributes {stable_mosaic.version = 11 : i64} {
  func.func @_diff_sigmoid_kernel(%arg0: i32, %arg1: memref<4xf32, #tpu.memory_space<smem>>, %arg2: memref<8x256xf32, #tpu.memory_space<vmem>>, %arg3: memref<8x256xf32, #tpu.memory_space<vmem>>) attributes {dimension_semantics = [#tpu.dimension_semantics<parallel>], iteration_bounds = array<i64: 1>, scalar_prefetch = 1 : i64, scratch_operands = 0 : i64, tpu.core_type = #tpu.core_type<tc>, window_params = [{transform_indices = @transform_0, window_bounds = array<i64: 8, 256>}, {transform_indices = @transform_1, window_bounds = array<i64: 8, 256>}]} {
    %c0 = arith.constant 0 : index
    %0 = memref.load %arg1[%c0] : memref<4xf32, #tpu.memory_space<smem>>
    %c1 = arith.constant 1 : index
    %1 = memref.load %arg1[%c1] : memref<4xf32, #tpu.memory_space<smem>>
    %c2 = arith.constant 2 : index
    %2 = memref.load %arg1[%c2] : memref<4xf32, #tpu.memory_space<smem>>
    %c3 = arith.constant 3 : index
    %3 = memref.load %arg1[%c3] : memref<4xf32, #tpu.memory_space<smem>>
    %c0_0 = arith.constant 0 : index
    %c0_1 = arith.constant 0 : index
    %4 = vector.load %arg2[%c0_0, %c0_1] : memref<8x256xf32, #tpu.memory_space<vmem>>, vector<8x256xf32>
    %5 = vector.broadcast %0 : f32 to vector<8x256xf32>
    %6 = arith.subf %4, %5 : vector<8x256xf32>
    %7 = vector.broadcast %1 : f32 to vector<8x256xf32>
    %8 = arith.mulf %7, %6 : vector<8x256xf32>
    %9 = math.absf %8 : vector<8x256xf32>
    %cst = arith.constant 0.000000e+00 : f32
    %10 = vector.broadcast %cst : f32 to vector<8x256xf32>
    %11 = arith.subf %10, %9 : vector<8x256xf32>
    %12 = math.exp %11 : vector<8x256xf32>
    %13 = arith.addf %12, %12 : vector<8x256xf32>
    %14 = vector.broadcast %2 : f32 to vector<8x256xf32>
    %15 = arith.mulf %14, %13 : vector<8x256xf32>
    %16 = arith.mulf %12, %12 : vector<8x256xf32>
    %cst_2 = arith.constant 1.000000e+00 : f32
    %17 = vector.broadcast %cst_2 : f32 to vector<8x256xf32>
    %18 = arith.addf %17, %16 : vector<8x256xf32>
    %19 = vector.broadcast %3 : f32 to vector<8x256xf32>
    %20 = arith.mulf %19, %18 : vector<8x256xf32>
    %21 = arith.addf %13, %20 : vector<8x256xf32>
    %22 = arith.divf %15, %21 : vector<8x256xf32>
    %c0_3 = arith.constant 0 : index
    %c0_4 = arith.constant 0 : index
    %23 = vector.load %arg3[%c0_3, %c0_4] : memref<8x256xf32, #tpu.memory_space<vmem>>, vector<8x256xf32>
    tpu.vector_store %arg3[%c0_3, %c0_4], %22 {strides = array<i32>} : memref<8x256xf32, #tpu.memory_space<vmem>>, vector<8x256xf32>,
    return
  }
  func.func @transform_0(%arg0: i32, %arg1: memref<4xf32, #tpu.memory_space<smem>>) -> (i32, i32) {
    %c0_i32 = arith.constant 0 : i32
    %c0_i32_0 = arith.constant 0 : i32
    return %arg0, %c0_i32 : i32, i32
  }
  func.func @transform_1(%arg0: i32, %arg1: memref<4xf32, #tpu.memory_space<smem>>) -> (i32, i32) {
    %c0_i32 = arith.constant 0 : i32
    %c0_i32_0 = arith.constant 0 : i32
    return %arg0, %c0_i32 : i32, i32
  }
}

</mosaic_0001>

<llo_original>
// kernel: tpu_custom_call.1
$region0: #{tpu_custom_call.1}
  #allocation0 [shape = 'u32[]', space=smem, size = 0x4, offset = 0x4, fixed_abs, tag = 'smem constant byte address 0x4 - core index']
  #allocation1 [shape = 'u32[144,128]{1,0:T(1,128)}', space=vmem, size = 0x12000, scoped, tag = 'internal scratch']
  #allocation2 [shape = 's32[1]{0}', space=sflag, size = 0x4, scoped, tag = 'scoped memory for tpu_custom_call.1']
  #allocation3 [shape = 'u8[512]{0}', space=smem, size = 0x200, scoped, tag = 'prefetched SMEM operand 0']
  %s0 = inlined_call_operand.hbm [shape: f32[4], index: 0, kind: input, shape index: {}]
  %s1 = inlined_call_operand.hbm [shape: f32[8,256], index: 1, kind: input, shape index: {}]
  %s2 = inlined_call_operand.hbm [shape: f32[8,256], index: 2, kind: output, shape index: {}]
  %s3 = sld [smem:[#allocation0]]
  $region18: #{tpu_custom_call.1} parent=0
    _
  %s5 = ssub.s32 1, %s3
  %s6 = scalar_select 0, %s5, %s3
  %8 = dma.hbm_to_smem %s0, 16, [#allocation3], [#allocation2]
  %9 = dma.done [#allocation2], 16
  %10 = sfence
  $region1: #{tpu_custom_call.1} parent=0
    #allocation4 [shape = 'u8[8192]{0}', space=vmem, size = 0x2000, scoped, tag = 'input window, operand 1, single buffered']
    #allocation5 [shape = 's32[1]{0}', space=sflag, size = 0x4, scoped, tag = 'scoped memory for tpu_custom_call.1']
    #allocation6 [shape = 's32[1]{0}', space=sflag, size = 0x4, scoped, tag = 'scoped memory for tpu_custom_call.1']
    #allocation7 [shape = 'u8[8192]{0}', space=vmem, size = 0x2000, scoped, tag = 'output window, operand 0, single buffered']
    %11 = vsyncpa [#allocation5], 0
    %12 = vsyncpa [#allocation6], 0
    // Predicated region
    $region2: #{tpu_custom_call.1} parent=1 // pred_check
      _
    $region3: #{tpu_custom_call.1} parent=1 // pred_check_branch
      %14 = sbr.rel (0) target = $region5
    $region4: #{tpu_custom_call.1} parent=1 // pred_region
      %s16 = ssub.s32 256, 256
      %17 = vsyncadd [#allocation5], %s16
      %s19 = sshll.u32 [#allocation4], 4
      %s20 = int_to_ptr.vmem [resolvable:$true] %s19
      %22 = dma.hbm_to_vmem [thread:$0]  %s1, 256, %s20, [#allocation5]
    $region5: #{tpu_custom_call.1} parent=1 // pred_fallthru
      _
    // Predicated region
    $region6: #{tpu_custom_call.1} parent=1 // pred_check
      _
    $region7: #{tpu_custom_call.1} parent=1 // pred_check_branch
      %24 = sbr.rel (0) target = $region9
    $region8: #{tpu_custom_call.1} parent=1 // pred_region
      %25 = dma.done [#allocation5], 256
    $region9: #{tpu_custom_call.1} parent=1 // pred_fallthru
      _
    %s26 = sld [smem:[#allocation3]]
    %s27 = sld [smem:[#allocation3 + $0x1]]
    %s28 = sld [smem:[#allocation3 + $0x2]]
    %s29 = sld [smem:[#allocation3 + $0x3]]
    %v30 = vld [vmem:[#allocation4] sm:$0xff]
    %v31 = vld [vmem:[#allocation4 + $0x8] sm:$0xff]
    %v32 = vstv %s26
    %v33 = vsub.f32 %v30, %v32
    %v34 = vsub.f32 %v31, %v32
    %v35 = vstv %s27
    %v36 = vmul.f32 %v35, %v33
    %v37 = vmul.f32 %v35, %v34
    %v38 = vand.u32 2147483647, %v36
    %v39 = vand.u32 2147483647, %v37
    %v40 = vsub.f32 0.0, %v38
    %v41 = vsub.f32 0.0, %v39
    %v42 = vmul.f32 %v40, 1.442695
    %v43 = vpow.pop %v42
    %v44 = vmul.f32 %v41, 1.442695
    %v45 = vpow.pop %v44
    %v46 = vadd.f32 %v43, %v43
    %v47 = vadd.f32 %v45, %v45
    %v48 = vstv %s28
    %v49 = vmul.f32 %v48, %v46
    %v50 = vmul.f32 %v48, %v47
    %v51 = vmul.f32 %v43, %v43
    %v52 = vmul.f32 %v45, %v45
    %v53 = vadd.f32 %v51, 1.0
    %v54 = vadd.f32 %v52, 1.0
    %v55 = vstv %s29
    %v56 = vmul.f32 %v55, %v53
    %v57 = vmul.f32 %v55, %v54
    %v58 = vadd.f32 %v46, %v56
    %v59 = vadd.f32 %v47, %v57
    %v60 = vrcp.pop %v58
    %v61 = vmul.f32 %v49, %v60
    %v62 = vrcp.pop %v59
    %v63 = vmul.f32 %v50, %v62
    %64 = vst [vmem:[#allocation7] sm:$0xff] %v61
    %65 = vst [vmem:[#allocation7 + $0x8] sm:$0xff] %v63
    // Predicated region
    $region10: #{tpu_custom_call.1} parent=1 // pred_check
      _
    $region11: #{tpu_custom_call.1} parent=1 // pred_check_branch
      %67 = sbr.rel (0) target = $region13
    $region12: #{tpu_custom_call.1} parent=1 // pred_region
      %s69 = ssub.s32 256, 256
      %70 = vsyncadd [#allocation6], %s69
      %s72 = sshll.u32 [#allocation7], 4
      %s73 = int_to_ptr.vmem [resolvable:$true] %s72
      %75 = dma.vmem_to_hbm [thread:$0]  %s73, 256, %s2, [#allocation6]
    $region13: #{tpu_custom_call.1} parent=1 // pred_fallthru
      _
    // Predicated region
    $region14: #{tpu_custom_call.1} parent=1 // pred_check
      _
    $region15: #{tpu_custom_call.1} parent=1 // pred_check_branch
      %77 = sbr.rel (0) target = $region17
    $region16: #{tpu_custom_call.1} parent=1 // pred_region
      %78 = dma.done [#allocation6], 256
    $region17: #{tpu_custom_call.1} parent=1 // pred_fallthru
      _
    %79 = vsyncpa [#allocation5], 1
    %80 = vsyncpa [#allocation6], 1

</llo_original>
